<compile_context>
chip_gen: v6e
topology: v6e:2x2x1
jax: 0.10.0
libtpu: 0.0.40
codegen_flags: <defaults>
</compile_context>

<pallas_src>
import jax
import jax.numpy as jnp
from jax import lax
from jax.experimental import pallas as pl
from jax.experimental.pallas import tpu as pltpu

# Problem sizes (small, consistent with the module's forward)
N, C_IN, H, W = 2, 4, 16, 16
C_OUT = 8
KH = KW = 3
PAD = 1
EPS = 1e-5
KC = KH * KW * C_IN          # 36 im2col rows
L = N * H * W                # 512 lanes


def _restr_kernel(p_ref, wgb_ref, o_ref):
    """Fused conv3x3 (one im2col matmul) + BatchNorm (batch stats) + ReLU.

    p_ref   : (KC, L) = (36, 512)  im2col patches, rows (kh,kw,cin), cols (n,h,w)
    wgb_ref : (C_OUT, KC + 2)      [conv weight | gamma | beta] packed slab
    o_ref   : (N, C_OUT, H*W)      output, channel-major NCHW slabs
    """
    w = wgb_ref[:, :KC]                 # (8, 36) conv weights
    g = wgb_ref[:, KC:KC + 1]           # (8, 1)  BN gamma
    b = wgb_ref[:, KC + 1:KC + 2]       # (8, 1)  BN beta

    # Single MXU matmul -> channel-major accumulator (8 sublanes x 512 lanes).
    acc = jnp.dot(w, p_ref[...], preferred_element_type=jnp.float32)

    # One-pass per-channel moments over (N, H, W) == the lane axis (XLU reduce).
    inv_cnt = 1.0 / float(L)
    s1 = jnp.sum(acc, axis=-1, keepdims=True)
    s2 = jnp.sum(acc * acc, axis=-1, keepdims=True)
    mean = s1 * inv_cnt
    # Biased variance (PyTorch train-mode BN); clamp vs. catastrophic cancellation.
    var = jnp.maximum(s2 * inv_cnt - mean * mean, 0.0)

    # Fused BN affine + ReLU: one FMA-style pass over the (8, L) tensor.
    scale = g * lax.rsqrt(var + EPS)    # rsqrt -> EUP slot
    shift = b - mean * scale
    y = jnp.maximum(acc * scale + shift, 0.0)

    # Lane-aligned (multiple-of-128 offsets) unmasked stores, already NCHW-ordered.
    for n in range(N):
        o_ref[n] = y[:, n * (H * W):(n + 1) * (H * W)]


def restr_block_pallas(x_nchw, w_oihw, bias, gamma, beta):
    """Wrapper: NCHW in / NCHW out, mirroring the PyTorch module (train-mode BN)."""
    # Conv bias is mathematically cancelled by the training-mode BN mean subtraction.
    del bias

    x = x_nchw.astype(jnp.float32)
    x_pad = jnp.pad(x, ((0, 0), (0, 0), (PAD, PAD), (PAD, PAD)))  # (N, C_IN, H+2, W+2)

    # im2col patches in (kh, kw, cin) row order: 36 slices of (N, H, W) stacked
    # into (36, N, H, W); the reshape to (36, N*H*W) is a free row-major view.
    taps = [x_pad[:, c, kh:kh + H, kw:kw + W]
            for kh in range(KH) for kw in range(KW) for c in range(C_IN)]
    patches = jnp.stack(taps, axis=0).reshape(KC, L)              # (36, 512)

    # OIHW -> (C_OUT, KH, KW, C_IN) -> (C_OUT, 36), matching the patch row order.
    w2d = jnp.transpose(w_oihw, (0, 2, 3, 1)).reshape(C_OUT, KC).astype(jnp.float32)
    # Pack [weight | gamma | beta] into one (8, 38) slab -> single parameter DMA.
    wgb = jnp.concatenate(
        [w2d,
         gamma.reshape(C_OUT, 1).astype(jnp.float32),
         beta.reshape(C_OUT, 1).astype(jnp.float32)], axis=1)     # (8, 38)

    cost = pl.CostEstimate(
        flops=2 * C_OUT * KC * L + 6 * C_OUT * L,
        bytes_accessed=(KC * L + C_OUT * (KC + 2) + N * C_OUT * H * W) * 4,
        transcendentals=C_OUT)

    out = pl.pallas_call(
        _restr_kernel,
        out_shape=jax.ShapeDtypeStruct((N, C_OUT, H * W), jnp.float32),
        in_specs=[pl.BlockSpec(memory_space=pltpu.MemorySpace.VMEM)] * 2,
        out_specs=pl.BlockSpec(memory_space=pltpu.MemorySpace.VMEM),
        cost_estimate=cost,
    )(patches, wgb)

    # Free row-major reshape to NCHW (no transpose needed).
    return out.reshape(N, C_OUT, H, W)


def restr_block_ref(x_nchw, w_oihw, bias, gamma, beta):
    """Pure-JAX reference (mirrors PyTorch Conv2d + BatchNorm2d(train) + ReLU)."""
    y = lax.conv_general_dilated(
        x_nchw, w_oihw, window_strides=(1, 1),
        padding=((PAD, PAD), (PAD, PAD)),
        dimension_numbers=("NCHW", "OIHW", "NCHW"))
    y = y + bias[None, :, None, None]
    mean = y.mean(axis=(0, 2, 3), keepdims=True)
    var = ((y - mean) ** 2).mean(axis=(0, 2, 3), keepdims=True)
    y = (y - mean) / jnp.sqrt(var + EPS)
    y = y * gamma[None, :, None, None] + beta[None, :, None, None]
    return jnp.maximum(y, 0.0)


if __name__ == "__main__":
    key = jax.random.PRNGKey(0)
    kx, kw, kb, kg, kbt = jax.random.split(key, 5)

    # Deterministic synthetic parameters (Conv2d: (C_OUT, C_IN, 3, 3) + bias; BN: gamma/beta)
    x = jax.random.normal(kx, (N, C_IN, H, W), dtype=jnp.float32)
    fan_in = C_IN * KH * KW
    w = jax.random.normal(kw, (C_OUT, C_IN, KH, KW), dtype=jnp.float32) / jnp.sqrt(fan_in)
    b = 0.1 * jax.random.normal(kb, (C_OUT,), dtype=jnp.float32)
    gamma = 1.0 + 0.1 * jax.random.normal(kg, (C_OUT,), dtype=jnp.float32)
    beta = 0.1 * jax.random.normal(kbt, (C_OUT,), dtype=jnp.float32)

    out = restr_block_pallas(x, w, b, gamma, beta)
    out = jax.block_until_ready(out)

    ref = restr_block_ref(x, w, b, gamma, beta)
    assert out.shape == (N, C_OUT, H, W)
    assert jnp.allclose(out, ref, atol=1e-4, rtol=1e-4), (
        float(jnp.max(jnp.abs(out - ref))))

    print("KERNEL_OK")
</pallas_src>

<mosaic_0001>
module attributes {stable_mosaic.version = 11 : i64} {
  func.func @_restr_kernel(%arg0: memref<36x512xf32, #tpu.memory_space<vmem>>, %arg1: memref<8x38xf32, #tpu.memory_space<vmem>>, %arg2: memref<2x8x256xf32, #tpu.memory_space<vmem>>) attributes {dimension_semantics = [], scalar_prefetch = 0 : i64, scratch_operands = 0 : i64, tpu.core_type = #tpu.core_type<tc>} {
    %c0 = arith.constant 0 : index
    %c0_0 = arith.constant 0 : index
    %0 = vector.load %arg1[%c0, %c0_0] : memref<8x38xf32, #tpu.memory_space<vmem>>, vector<8x36xf32>
    %c0_1 = arith.constant 0 : index
    %c36 = arith.constant 36 : index
    %1 = vector.load %arg1[%c0_1, %c36] : memref<8x38xf32, #tpu.memory_space<vmem>>, vector<8x1xf32>
    %c0_2 = arith.constant 0 : index
    %c37 = arith.constant 37 : index
    %2 = vector.load %arg1[%c0_2, %c37] : memref<8x38xf32, #tpu.memory_space<vmem>>, vector<8x1xf32>
    %c0_3 = arith.constant 0 : index
    %c0_4 = arith.constant 0 : index
    %3 = vector.load %arg0[%c0_3, %c0_4] : memref<36x512xf32, #tpu.memory_space<vmem>>, vector<36x512xf32>
    %cst = arith.constant dense<0.000000e+00> : vector<8x512xf32>
    %4 = tpu.matmul %0, %3, %cst {dimension_numbers = #tpu.dot_dimension_numbers<[1], [0], [0], [1], [0, 0, 1, 1], [], []>} : vector<8x36xf32>, vector<36x512xf32>, vector<8x512xf32> -> vector<8x512xf32>
    %cst_5 = arith.constant dense<0.000000e+00> : vector<8xf32>
    %5 = vector.multi_reduction <add>, %4, %cst_5 [1] : vector<8x512xf32> to vector<8xf32>
    %6 = vector.shape_cast %5 : vector<8xf32> to vector<8x1xf32>
    %7 = arith.mulf %4, %4 : vector<8x512xf32>
    %cst_6 = arith.constant dense<0.000000e+00> : vector<8xf32>
    %8 = vector.multi_reduction <add>, %7, %cst_6 [1] : vector<8x512xf32> to vector<8xf32>
    %9 = vector.shape_cast %8 : vector<8xf32> to vector<8x1xf32>
    %cst_7 = arith.constant 0.001953125 : f32
    %10 = vector.broadcast %cst_7 : f32 to vector<8x1xf32>
    %11 = arith.mulf %6, %10 : vector<8x1xf32>
    %cst_8 = arith.constant 0.001953125 : f32
    %12 = vector.broadcast %cst_8 : f32 to vector<8x1xf32>
    %13 = arith.mulf %9, %12 : vector<8x1xf32>
    %14 = arith.mulf %11, %11 : vector<8x1xf32>
    %15 = arith.subf %13, %14 : vector<8x1xf32>
    %cst_9 = arith.constant 0.000000e+00 : f32
    %16 = vector.broadcast %cst_9 : f32 to vector<8x1xf32>
    %17 = arith.maximumf %15, %16 : vector<8x1xf32>
    %cst_10 = arith.constant 9.99999974E-6 : f32
    %18 = vector.broadcast %cst_10 : f32 to vector<8x1xf32>
    %19 = arith.addf %17, %18 : vector<8x1xf32>
    %20 = math.rsqrt %19 : vector<8x1xf32>
    %21 = arith.mulf %1, %20 : vector<8x1xf32>
    %22 = arith.mulf %11, %21 : vector<8x1xf32>
    %23 = arith.subf %2, %22 : vector<8x1xf32>
    %24 = vector.broadcast %21 : vector<8x1xf32> to vector<8x512xf32>
    %25 = arith.mulf %4, %24 : vector<8x512xf32>
    %26 = vector.broadcast %23 : vector<8x1xf32> to vector<8x512xf32>
    %27 = arith.addf %25, %26 : vector<8x512xf32>
    %cst_11 = arith.constant 0.000000e+00 : f32
    %28 = vector.broadcast %cst_11 : f32 to vector<8x512xf32>
    %29 = arith.maximumf %27, %28 : vector<8x512xf32>
    %30 = vector.extract_strided_slice %29 {offsets = [0, 0], sizes = [8, 256], strides = [1, 1]} : vector<8x512xf32> to vector<8x256xf32>
    %c0_12 = arith.constant 0 : index
    %c0_13 = arith.constant 0 : index
    %c0_14 = arith.constant 0 : index
    %31 = vector.load %arg2[%c0_12, %c0_13, %c0_14] : memref<2x8x256xf32, #tpu.memory_space<vmem>>, vector<1x8x256xf32>
    %32 = vector.shape_cast %31 : vector<1x8x256xf32> to vector<8x256xf32>
    %33 = vector.shape_cast %30 : vector<8x256xf32> to vector<1x8x256xf32>
    tpu.vector_store %arg2[%c0_12, %c0_13, %c0_14], %33 {strides = array<i32>} : memref<2x8x256xf32, #tpu.memory_space<vmem>>, vector<1x8x256xf32>,
    %34 = vector.extract_strided_slice %29 {offsets = [0, 256], sizes = [8, 256], strides = [1, 1]} : vector<8x512xf32> to vector<8x256xf32>
    %c1 = arith.constant 1 : index
    %c0_15 = arith.constant 0 : index
    %c0_16 = arith.constant 0 : index
    %35 = vector.load %arg2[%c1, %c0_15, %c0_16] : memref<2x8x256xf32, #tpu.memory_space<vmem>>, vector<1x8x256xf32>
    %36 = vector.shape_cast %35 : vector<1x8x256xf32> to vector<8x256xf32>
    %37 = vector.shape_cast %34 : vector<8x256xf32> to vector<1x8x256xf32>
    tpu.vector_store %arg2[%c1, %c0_15, %c0_16], %37 {strides = array<i32>} : memref<2x8x256xf32, #tpu.memory_space<vmem>>, vector<1x8x256xf32>,
    return
  }
}

</mosaic_0001>

<llo_original>
// kernel: tpu_custom_call.1
$region0: #{tpu_custom_call.1}
  #allocation0 [shape = 'u32[]', space=smem, size = 0x4, offset = 0x4, fixed_abs, tag = 'smem constant byte address 0x4 - core index']
  #allocation1 [shape = 'u32[144,128]{1,0:T(1,128)}', space=vmem, size = 0x12000, scoped, tag = 'internal scratch']
  %s0 = inlined_call_operand.hbm [shape: f32[36,512], index: 0, kind: input, shape index: {}]
  %s1 = inlined_call_operand.hbm [shape: f32[8,38], index: 1, kind: input, shape index: {}]
  %s2 = inlined_call_operand.hbm [shape: f32[2,8,256], index: 2, kind: output, shape index: {}]
  %s3 = sld [smem:[#allocation0]]
  $region26: #{tpu_custom_call.1} parent=0
    _
  %s5 = ssub.s32 1, %s3
  %s6 = scalar_select 0, %s5, %s3
  $region1: #{tpu_custom_call.1} parent=0
    #allocation2 [shape = 'u8[81920]{0}', space=vmem, size = 0x14000, scoped, tag = 'input window, operand 0, single buffered']
    #allocation3 [shape = 's32[1]{0}', space=sflag, size = 0x4, scoped, tag = 'scoped memory for tpu_custom_call.1']
    #allocation4 [shape = 's32[1]{0}', space=sflag, size = 0x4, scoped, tag = 'scoped memory for tpu_custom_call.1']
    #allocation5 [shape = 'u8[4096]{0}', space=vmem, size = 0x1000, scoped, tag = 'input window, operand 1, single buffered']
    #allocation6 [shape = 's32[1]{0}', space=sflag, size = 0x4, scoped, tag = 'scoped memory for tpu_custom_call.1']
    #allocation7 [shape = 'u8[16384]{0}', space=vmem, size = 0x4000, scoped, tag = 'output window, operand 0, single buffered']
    %7 = vsyncpa [#allocation3], 0
    %8 = vsyncpa [#allocation6], 0
    %9 = vsyncpa [#allocation4], 0
    // Predicated region
    $region2: #{tpu_custom_call.1} parent=1 // pred_check
      _
    $region3: #{tpu_custom_call.1} parent=1 // pred_check_branch
      %11 = sbr.rel (0) target = $region5
    $region4: #{tpu_custom_call.1} parent=1 // pred_region
      %s13 = ssub.s32 2560, 2560
      %14 = vsyncadd [#allocation3], %s13
      %s15 = sshll.u32 [#allocation2], 4
      %s16 = int_to_ptr.vmem [resolvable:$true] %s15
      %21 = dma.hbm_to_vmem [thread:$0]  %s0, 2560, %s16, [#allocation3], 512, 512, 32
    $region5: #{tpu_custom_call.1} parent=1 // pred_fallthru
      _
    // Predicated region
    $region6: #{tpu_custom_call.1} parent=1 // pred_check
      _
    $region7: #{tpu_custom_call.1} parent=1 // pred_check_branch
      %23 = sbr.rel (0) target = $region9
    $region8: #{tpu_custom_call.1} parent=1 // pred_region
      %s25 = ssub.s32 128, 128
      %26 = vsyncadd [#allocation6], %s25
      %s28 = sshll.u32 [#allocation5], 4
      %s29 = int_to_ptr.vmem [resolvable:$true] %s28
      %31 = dma.hbm_to_vmem [thread:$0]  %s1, 128, %s29, [#allocation6]
    $region9: #{tpu_custom_call.1} parent=1 // pred_fallthru
      _
    // Predicated region
    $region10: #{tpu_custom_call.1} parent=1 // pred_check
      _
    $region11: #{tpu_custom_call.1} parent=1 // pred_check_branch
      %33 = sbr.rel (0) target = $region13
    $region12: #{tpu_custom_call.1} parent=1 // pred_region
      %34 = dma.done [#allocation3], 2560
    $region13: #{tpu_custom_call.1} parent=1 // pred_fallthru
      _
    // Predicated region
    $region14: #{tpu_custom_call.1} parent=1 // pred_check
      _
    $region15: #{tpu_custom_call.1} parent=1 // pred_check_branch
      %36 = sbr.rel (0) target = $region17
    $region16: #{tpu_custom_call.1} parent=1 // pred_region
      %37 = dma.done [#allocation6], 128
    $region17: #{tpu_custom_call.1} parent=1 // pred_fallthru
      _
    %v38 = vld [vmem:[#allocation5] sm:$0xff]
    %v39 = vld [vmem:[#allocation2] sm:$0xff]
    %v40 = vld [vmem:[#allocation2 + $0x8] sm:$0xff]
    %v41 = vld [vmem:[#allocation2 + $0x10] sm:$0xff]
    %v42 = vld [vmem:[#allocation2 + $0x18] sm:$0xff]
    %v43 = vld [vmem:[#allocation2 + $0x20] sm:$0xff]
    %v44 = vld [vmem:[#allocation2 + $0x28] sm:$0xff]
    %v45 = vld [vmem:[#allocation2 + $0x30] sm:$0xff]
    %v46 = vld [vmem:[#allocation2 + $0x38] sm:$0xff]
    %v47 = vld [vmem:[#allocation2 + $0x40] sm:$0xff]
    %v48 = vld [vmem:[#allocation2 + $0x48] sm:$0xff]
    %v49 = vld [vmem:[#allocation2 + $0x50] sm:$0xff]
    %v50 = vld [vmem:[#allocation2 + $0x58] sm:$0xff]
    %v51 = vld [vmem:[#allocation2 + $0x60] sm:$0xff]
    %v52 = vld [vmem:[#allocation2 + $0x68] sm:$0xff]
    %v53 = vld [vmem:[#allocation2 + $0x70] sm:$0xff]
    %v54 = vld [vmem:[#allocation2 + $0x78] sm:$0xff]
    %v55 = vld [vmem:[#allocation2 + $0x80] sm:$0xf]
    %v56 = vld [vmem:[#allocation2 + $0x88] sm:$0xf]
    %v57 = vld [vmem:[#allocation2 + $0x90] sm:$0xf]
    %v58 = vld [vmem:[#allocation2 + $0x98] sm:$0xf]
    %vm59 = vcmask 293888
    %v61 = vsel %vm59, %v38, 0
    %vm63 = vcmask 1043456
    %v65 = vsel %vm63, %v55, 0
    %v68 = vsel %vm63, %v56, 0
    %v71 = vsel %vm63, %v57, 0
    %v74 = vsel %vm63, %v58, 0
    %76 = vmatprep.subr.mxu0 0.0
    %77 = vmatpush1.msra.mxu0 0.0
    %78 = vmatprep.subr.mxu0 0.0
    %79 = vmatpush1.msra.mxu0 0.0
    %80 = vmatprep.subr.mxu0 0.0
    %81 = vmatpush1.msra.mxu0 0.0
    %82 = vmatprep.subr.mxu0 0.0
    %83 = vmatpush1.msra.mxu0 0.0
    %84 = vmatprep.subr.mxu0 0.0
    %85 = vmatpush1.msra.mxu0 0.0
    %86 = vmatprep.subr.mxu0 0.0
    %87 = vmatpush1.msra.mxu0 0.0
    %88 = vmatprep.subr.mxu0 0.0
    %89 = vmatpush1.msra.mxu0 0.0
    %90 = vmatprep.subr.mxu0 0.0
    %91 = vmatpush1.msra.mxu0 0.0
    %92 = vmatprep.subr.mxu0 0.0
    %93 = vmatpush1.msra.mxu0 0.0
    %94 = vmatprep.subr.mxu0 0.0
    %95 = vmatpush1.msra.mxu0 0.0
    %96 = vmatprep.subr.mxu0 0.0
    %97 = vmatpush1.msra.mxu0 0.0
    %98 = vmatprep.subr.mxu0 %v68
    %99 = vmatpush1.msra.mxu0 %v65
    %100 = vmatprep.subr.mxu0 %v52
    %101 = vmatpush1.msra.mxu0 %v51
    %102 = vmatprep.subr.mxu0 %v48
    %103 = vmatpush1.msra.mxu0 %v47
    %104 = vmatprep.subr.mxu0 %v44
    %105 = vmatpush1.msra.mxu0 %v43
    %106 = vmatprep.subr.mxu0 %v40
    %107 = vmatpush1.msra.mxu0 %v39
    %108 = vmatprep.subr.mxu0 0.0
    %109 = vmatpush2.msra.mxu0 0.0
    %110 = vmatprep.subr.mxu0 0.0
    %111 = vmatpush2.msra.mxu0 0.0
    %112 = vmatprep.subr.mxu0 0.0
    %113 = vmatpush2.msra.mxu0 0.0
    %114 = vmatprep.subr.mxu0 0.0
    %115 = vmatpush2.msra.mxu0 0.0
    %116 = vmatprep.subr.mxu0 0.0
    %117 = vmatpush2.msra.mxu0 0.0
    %118 = vmatprep.subr.mxu0 0.0
    %119 = vmatpush2.msra.mxu0 0.0
    %120 = vmatprep.subr.mxu0 0.0
    %121 = vmatpush2.msra.mxu0 0.0
    %122 = vmatprep.subr.mxu0 0.0
    %123 = vmatpush2.msra.mxu0 0.0
    %124 = vmatprep.subr.mxu0 0.0
    %125 = vmatpush2.msra.mxu0 0.0
    %126 = vmatprep.subr.mxu0 0.0
    %127 = vmatpush2.msra.mxu0 0.0
    %128 = vmatprep.subr.mxu0 0.0
    %129 = vmatpush2.msra.mxu0 0.0
    %130 = vmatprep.subr.mxu0 0.0
    %131 = vmatpush2.msra.mxu0 0.0
    %132 = vmatprep.subr.mxu0 0.0
    %133 = vmatpush2.msra.mxu0 0.0
    %134 = vmatprep.subr.mxu0 0.0
    %135 = vmatpush2.msra.mxu0 0.0
    %136 = vmatprep.subr.mxu0 0.0
    %137 = vmatpush2.msra.mxu0 0.0
    %138 = vmatprep.subr.mxu0 0.0
    %139 = vmatpush2.msra.mxu0 0.0
    %140 = vmatprep.mubr.f32.mxu0 0.0
    %141 = vmatmul.mubr.f32.gmra.mxu0 %v61
    %v142 = vpop.f32.mrf.mxu0
    %v143 = vadd.f32 0.0, %v142
    %v144 = vpop.f32.mrf.mxu0
    %v145 = vadd.f32 0.0, %v144
    %146 = vdwg.mxu0
    %147 = vmatprep.subr.mxu0 0.0
    %148 = vmatpush1.msra.mxu0 0.0
    %149 = vmatprep.subr.mxu0 0.0
    %150 = vmatpush1.msra.mxu0 0.0
    %151 = vmatprep.subr.mxu0 0.0
    %152 = vmatpush1.msra.mxu0 0.0
    %153 = vmatprep.subr.mxu0 0.0
    %154 = vmatpush1.msra.mxu0 0.0
    %155 = vmatprep.subr.mxu0 0.0
    %156 = vmatpush1.msra.mxu0 0.0
    %157 = vmatprep.subr.mxu0 0.0
    %158 = vmatpush1.msra.mxu0 0.0
    %159 = vmatprep.subr.mxu0 0.0
    %160 = vmatpush1.msra.mxu0 0.0
    %161 = vmatprep.subr.mxu0 0.0
    %162 = vmatpush1.msra.mxu0 0.0
    %163 = vmatprep.subr.mxu0 0.0
    %164 = vmatpush1.msra.mxu0 0.0
    %165 = vmatprep.subr.mxu0 0.0
    %166 = vmatpush1.msra.mxu0 0.0
    %167 = vmatprep.subr.mxu0 0.0
    %168 = vmatpush1.msra.mxu0 0.0
    %169 = vmatprep.subr.mxu0 %v74
    %170 = vmatpush1.msra.mxu0 %v71
    %171 = vmatprep.subr.mxu0 %v54
    %172 = vmatpush1.msra.mxu0 %v53
    %173 = vmatprep.subr.mxu0 %v50
    %174 = vmatpush1.msra.mxu0 %v49
    %175 = vmatprep.subr.mxu0 %v46
    %176 = vmatpush1.msra.mxu0 %v45
    %177 = vmatprep.subr.mxu0 %v42
    %178 = vmatpush1.msra.mxu0 %v41
    %179 = vmatprep.subr.mxu0 0.0
    %180 = vmatpush2.msra.mxu0 0.0
    %181 = vmatprep.subr.mxu0 0.0
    %182 = vmatpush2.msra.mxu0 0.0
    %183 = vmatprep.subr.mxu0 0.0
    %184 = vmatpush2.msra.mxu0 0.0
    %185 = vmatprep.subr.mxu0 0.0
    %186 = vmatpush2.msra.mxu0 0.0
    %187 = vmatprep.subr.mxu0 0.0
    %188 = vmatpush2.msra.mxu0 0.0
    %189 = vmatprep.subr.mxu0 0.0
    %190 = vmatpush2.msra.mxu0 0.0
    %191 = vmatprep.subr.mxu0 0.0
    %192 = vmatpush2.msra.mxu0 0.0
    %193 = vmatprep.subr.mxu0 0.0
    %194 = vmatpush2.msra.mxu0 0.0
    %195 = vmatprep.subr.mxu0 0.0
    %196 = vmatpush2.msra.mxu0 0.0
    %197 = vmatprep.subr.mxu0 0.0
    %198 = vmatpush2.msra.mxu0 0.0
    %199 = vmatprep.subr.mxu0 0.0
    %200 = vmatpush2.msra.mxu0 0.0
    %201 = vmatprep.subr.mxu0 0.0
    %202 = vmatpush2.msra.mxu0 0.0
    %203 = vmatprep.subr.mxu0 0.0
    %204 = vmatpush2.msra.mxu0 0.0
    %205 = vmatprep.subr.mxu0 0.0
    %206 = vmatpush2.msra.mxu0 0.0
    %207 = vmatprep.subr.mxu0 0.0
    %208 = vmatpush2.msra.mxu0 0.0
    %209 = vmatprep.subr.mxu0 0.0
    %210 = vmatpush2.msra.mxu0 0.0
    %211 = vmatprep.mubr.f32.mxu0 0.0
    %212 = vmatmul.mubr.f32.gmra.mxu0 %v61
    %v213 = vpop.f32.mrf.mxu0
    %v214 = vadd.f32 0.0, %v213
    %v215 = vpop.f32.mrf.mxu0
    %v216 = vadd.f32 0.0, %v215
    %217 = vdwg.mxu0
    %v218 = vadd.f32 %v143, %v145
    %v219 = vadd.f32 %v218, %v214
    %v220 = vadd.f32 %v219, %v216
    %221 = vadd.xlane.f32.xlu0 %v220
    %v222 = vpop.xlane.xlu0 %221
    %v223 = vmul.f32 %v143, %v143
    %v224 = vmul.f32 %v145, %v145
    %v225 = vmul.f32 %v214, %v214
    %v226 = vmul.f32 %v216, %v216
    %v227 = vadd.f32 %v223, %v224
    %v228 = vadd.f32 %v227, %v225
    %v229 = vadd.f32 %v228, %v226
    %230 = vadd.xlane.f32.xlu0 %v229
    %v231 = vpop.xlane.xlu0 %230
    %v232 = vmul.f32 %v222, 0.001953125
    %v233 = vmul.f32 %v231, 0.001953125
    %v234 = vmul.f32 %v232, %v232
    %v235 = vsub.f32 %v233, %v234
    %v236 = vmax.f32 %v235, 0.0
    %v237 = vadd.f32 %v236, 1e-05
    %v238 = vrsqrt.pop %v237
    %v239 = vmul.f32 %v38, %v238
    %v240 = vmul.f32 %v232, %v239
    %242 = vrot.lane.b32.xlu0 %v240, 1
    %v243 = vpop.permute.xlu0 %242
    %v245 = vsub.f32 %v38, %v243
    %247 = vset.pattern.permute.xlu0 36
    %248 = vperm.xlu0 %247, %v239
    %v249 = vpop.permute.xlu0 %248
    %v251 = vmul.f32 %v143, %v249
    %v252 = vmul.f32 %v145, %v249
    %v253 = vmul.f32 %v214, %v249
    %v254 = vmul.f32 %v216, %v249
    %256 = vset.pattern.permute.xlu0 37
    %257 = vperm.xlu0 %256, %v245
    %v258 = vpop.permute.xlu0 %257
    %v260 = vadd.f32 %v251, %v258
    %v261 = vadd.f32 %v252, %v258
    %v262 = vadd.f32 %v253, %v258
    %v263 = vadd.f32 %v254, %v258
    %v264 = vmax.f32 %v260, 0.0
    %v265 = vmax.f32 %v261, 0.0
    %v266 = vmax.f32 %v262, 0.0
    %v267 = vmax.f32 %v263, 0.0
    %268 = vst [vmem:[#allocation7] sm:$0xff] %v264
    %269 = vst [vmem:[#allocation7 + $0x8] sm:$0xff] %v265
    %s270 = scalar_lea.vmem [#allocation7], 16
    %271 = vst [vmem:[%s270] sm:$0xff] %v266
    %272 = vst [vmem:[%s270 + $0x8] sm:$0xff] %v267
    // Predicated region
    $region18: #{tpu_custom_call.1} parent=1 // pred_check
      _
    $region19: #{tpu_custom_call.1} parent=1 // pred_check_branch
      %274 = sbr.rel (0) target = $region21
    $region20: #{tpu_custom_call.1} parent=1 // pred_region
      %s276 = ssub.s32 512, 512
      %277 = vsyncadd [#allocation4], %s276
      %s278 = sshll.u32 [#allocation7], 4
      %s279 = int_to_ptr.vmem [resolvable:$true] %s278
      %284 = dma.vmem_to_hbm [thread:$0]  %s279, 512, %s2, [#allocation4], 256, 256, 16
    $region21: #{tpu_custom_call.1} parent=1 // pred_fallthru
      _
    // Predicated region
    $region22: #{tpu_custom_call.1} parent=1 // pred_check
      _
    $region23: #{tpu_custom_call.1} parent=1 // pred_check_branch
      %286 = sbr.rel (0) target = $region25
    $region24: #{tpu_custom_call.1} parent=1 // pred_region
      %287 = dma.done [#allocation4], 512
    $region25: #{tpu_custom_call.1} parent=1 // pred_fallthru
      _
    %288 = vsyncpa [#allocation3], 1
    %289 = vsyncpa [#allocation6], 1
    %290 = vsyncpa [#allocation4], 1

</llo_original>
